<compile_context>
chip_gen: v7x
topology: tpu7x:2x2x1
jax: 0.10.0
libtpu: 0.0.40
codegen_flags: <defaults>
</compile_context>

<pallas_src>
import jax
import jax.numpy as jnp
from jax.experimental import pallas as pl
from jax.experimental.pallas import tpu as pltpu

C_PAD = 128                       # lane-dense channel padding
_VMEM_LIMIT = 32 * 1024 * 1024    # safe on v5e/v6e (128 MiB) and v7x (64 MiB)


def _silu(x):
    return x * jax.nn.sigmoid(x)


def _round_up(n, m):
    return ((n + m - 1) // m) * m


def _pad_cols(x, c=C_PAD):
    return jnp.pad(x, ((0, 0), (0, c - x.shape[1])))


def _pad_rows(x, n):
    return jnp.pad(x, ((0, n - x.shape[0]), (0, 0)))


def _pad_mat(w, r=C_PAD, c=C_PAD):
    return jnp.pad(w, ((0, r - w.shape[0]), (0, c - w.shape[1])))


# ---------------------------------------------------------------------------
# Kernel 1: fused DownBlock = EmbResBlock(ni, ni) + down conv (ni -> nf)
# ---------------------------------------------------------------------------

def downblock_kernel(x_ref, scale_ref, shift_ref,
                     w1_ref, b1_ref, w2_ref, b2_ref, wd_ref, bd_ref,
                     res_ref, down_ref):
    # TODO(synk): EmbResBlock's real definition (sparse 3D convs + optional
    # attention) is not in the provided source; modeled as an emb-modulated
    # residual MLP.  The stride-2 spnn.Conv3d is modeled as per-voxel 1x1
    # channel mixing (voxel count kept constant; torchsparse kernel-map
    # geometry is not reproducible here).
    h = x_ref[...]                                                 # [T, 128] f32
    h1 = jnp.dot(_silu(h).astype(jnp.bfloat16), w1_ref[...],
                 preferred_element_type=jnp.float32) + b1_ref[...]
    h1 = h1 * (1.0 + scale_ref[...]) + shift_ref[...]              # emb modulation
    h2 = jnp.dot(_silu(h1).astype(jnp.bfloat16), w2_ref[...],
                 preferred_element_type=jnp.float32) + b2_ref[...]
    r = h + h2                                                     # resnet output
    res_ref[...] = r
    down_ref[...] = (jnp.dot(r.astype(jnp.bfloat16), wd_ref[...],
                             preferred_element_type=jnp.float32) + bd_ref[...])


def downblock_call(xF, scale, shift, w1, b1, w2, b2, wd, bd, *, tile_n=128):
    n, c = xF.shape
    assert n % tile_n == 0
    row = pl.BlockSpec((tile_n, c), lambda i: (i, 0))
    const = lambda shp: pl.BlockSpec(shp, lambda i: (0, 0))
    flops = 3 * 2 * n * c * c
    bytes_accessed = 4 * 3 * n * c + 2 * 3 * c * c + 4 * 6 * c
    res, down = pl.pallas_call(
        downblock_kernel,
        out_shape=(jax.ShapeDtypeStruct((n, c), jnp.float32),
                   jax.ShapeDtypeStruct((n, c), jnp.float32)),
        grid=(n // tile_n,),
        in_specs=[row, const(scale.shape), const(shift.shape),
                  const(w1.shape), const(b1.shape),
                  const(w2.shape), const(b2.shape),
                  const(wd.shape), const(bd.shape)],
        out_specs=(row, row),
        compiler_params=pltpu.CompilerParams(
            dimension_semantics=("parallel",),
            vmem_limit_bytes=_VMEM_LIMIT),
        cost_estimate=pl.CostEstimate(flops=flops, transcendentals=2 * n * c,
                                      bytes_accessed=bytes_accessed),
    )(xF, scale, shift, w1, b1, w2, b2, wd, bd)
    return res, down


# ---------------------------------------------------------------------------
# Kernel 2: fused point branch
#   z1 = x[p2v] + Linear(SiLU(BN_eval(z.F)))        (voxel_to_point + PointBlock)
#   x  = scatter_mean(z1, p2v, num_voxels)          (point_to_voxel)
# Gather and scatter are one-hot matmuls on the MXU; the voxel output block is
# a VMEM-resident accumulator across the (sequential) point-tile grid.
# ---------------------------------------------------------------------------

def point_branch_kernel(z_ref, idxc_ref, idxr_ref, x_ref, bns_ref, bnb_ref,
                        w_ref, b_ref, cnt_ref, z1_ref, xo_ref):
    # TODO(synk): true torchsparse voxel_to_point uses trilinear interpolation
    # weights; modeled as nearest-voxel gather (one-hot matmul).
    @pl.when(pl.program_id(0) == 0)
    def _():
        xo_ref[...] = jnp.zeros_like(xo_ref)

    tile_p = z_ref.shape[0]
    nv_pad = x_ref.shape[0]

    # PointBlock update: Linear(SiLU(BN(z.F))) with eval-mode BN fused to affine.
    zn = z_ref[...] * bns_ref[...] + bnb_ref[...]
    upd = jnp.dot(_silu(zn).astype(jnp.bfloat16), w_ref[...],
                  preferred_element_type=jnp.float32) + b_ref[...]

    # voxel_to_point gather: onehot[tile_p, nv] @ x[nv, c]  (exact: 0/1 * f32)
    idx_col = idxc_ref[...]                                     # [tile_p, 1] i32
    cols = jax.lax.broadcasted_iota(jnp.int32, (tile_p, nv_pad), 1)
    onehot = (cols == idx_col).astype(jnp.float32)              # [tile_p, nv]
    gathered = jnp.dot(onehot, x_ref[...],
                       preferred_element_type=jnp.float32)

    z1 = gathered + upd
    z1_ref[...] = z1

    # point_to_voxel scatter-add: onehot_t[nv, tile_p] @ z1[tile_p, c],
    # accumulated into the resident voxel output block.
    idx_row = idxr_ref[...]                                     # [1, tile_p] i32
    rows = jax.lax.broadcasted_iota(jnp.int32, (nv_pad, tile_p), 0)
    onehot_t = (rows == idx_row).astype(jnp.float32)            # [nv, tile_p]
    xo_ref[...] += jnp.dot(onehot_t, z1, preferred_element_type=jnp.float32)

    @pl.when(pl.program_id(0) == pl.num_programs(0) - 1)
    def _():
        xo_ref[...] = xo_ref[...] * pl.reciprocal(cnt_ref[...], approx=True)


def point_branch_call(zF, idx_col, idx_row, xF, bn_scale, bn_bias, w, b, cnt,
                      *, tile_p=128):
    np_pad, c = zF.shape
    nv_pad = xF.shape[0]
    assert np_pad % tile_p == 0 and tile_p % 128 == 0
    const = lambda shp: pl.BlockSpec(shp, lambda i: (0, 0))
    flops = 2 * np_pad * c * c + 2 * 2 * np_pad * nv_pad * c
    bytes_accessed = 4 * (2 * np_pad * c + 2 * nv_pad * c + nv_pad) \
        + 2 * c * c + 8 * np_pad
    return pl.pallas_call(
        point_branch_kernel,
        out_shape=(jax.ShapeDtypeStruct((np_pad, c), jnp.float32),   # z1.F
                   jax.ShapeDtypeStruct((nv_pad, c), jnp.float32)),  # x.F (mean)
        grid=(np_pad // tile_p,),
        in_specs=[pl.BlockSpec((tile_p, c), lambda i: (i, 0)),       # z tile
                  pl.BlockSpec((tile_p, 1), lambda i: (i, 0)),       # p2v column
                  pl.BlockSpec((1, tile_p), lambda i: (0, i)),       # p2v row
                  const(xF.shape),                                   # x resident
                  const(bn_scale.shape), const(bn_bias.shape),
                  const(w.shape), const(b.shape),
                  const(cnt.shape)],
        out_specs=(pl.BlockSpec((tile_p, c), lambda i: (i, 0)),
                   const((nv_pad, c))),                              # accumulator
        compiler_params=pltpu.CompilerParams(
            dimension_semantics=("arbitrary",),    # sequential: resident accum
            vmem_limit_bytes=_VMEM_LIMIT),
        cost_estimate=pl.CostEstimate(flops=flops, transcendentals=np_pad * c,
                                      bytes_accessed=bytes_accessed),
    )(zF, idx_col, idx_row, xF, bn_scale, bn_bias, w, b, cnt)


# ---------------------------------------------------------------------------
# Parameter init (deterministic, channels pre-padded to C_PAD)
# ---------------------------------------------------------------------------

def init_spv_down_stage_params(key, n_emb, nfs=(32, 64, 128)):
    assert max(nfs) <= C_PAD
    params = {"downs": []}
    nf = nfs[0]
    for i in range(1, len(nfs)):           # DownBlock(ni, nf), num_layers=1
        ni, nf = nf, nfs[i]
        ks = jax.random.split(jax.random.fold_in(key, i), 4)
        blk = dict(
            ni=ni, nf=nf,
            # timestep-embedding projection (hoisted out of the kernel)
            wemb=0.05 * jax.random.normal(ks[0], (n_emb, 2 * ni), jnp.float32),
            bemb=jnp.zeros((1, 2 * ni), jnp.float32),
            # EmbResBlock channel mixers, zero-padded to [128, 128] bf16
            w1=_pad_mat(0.05 * jax.random.normal(ks[1], (ni, ni), jnp.float32)
                        ).astype(jnp.bfloat16),
            b1=_pad_cols(jnp.zeros((1, ni), jnp.float32)),
            w2=_pad_mat(0.05 * jax.random.normal(ks[2], (ni, ni), jnp.float32)
                        ).astype(jnp.bfloat16),
            b2=_pad_cols(jnp.zeros((1, ni), jnp.float32)),
            # self.down = spnn.Conv3d(ni, nf, 2, stride=2) stand-in
            wd=_pad_mat(0.05 * jax.random.normal(ks[3], (ni, nf), jnp.float32)
                        ).astype(jnp.bfloat16),
            bd=_pad_cols(jnp.zeros((1, nf), jnp.float32)),
        )
        params["downs"].append(blk)

    c0, cl = nfs[0], nfs[-1]
    kk = jax.random.split(jax.random.fold_in(key, 100), 5)
    params["point_block"] = dict(          # PointBlock(nfs[0], nfs[-1])
        gamma=1.0 + 0.1 * jax.random.normal(kk[0], (1, c0), jnp.float32),
        beta=0.1 * jax.random.normal(kk[1], (1, c0), jnp.float32),
        mean=0.1 * jax.random.normal(kk[2], (1, c0), jnp.float32),
        var=1.0 + 0.1 * jnp.abs(jax.random.normal(kk[3], (1, c0), jnp.float32)),
        w=_pad_mat(0.05 * jax.random.normal(kk[4], (c0, cl), jnp.float32)
                   ).astype(jnp.bfloat16),
        b=_pad_cols(jnp.zeros((1, cl), jnp.float32)),
    )
    return params


# ---------------------------------------------------------------------------
# SPVDownStage forward
# ---------------------------------------------------------------------------

def spv_down_stage_forward(params, xF, zF, emb, p2v, nv, *, tile_v=128, tile_p=128):
    np_real = zF.shape[0]
    nv_pad = _round_up(max(nv, 1), 128)            # lane-dense one-hot columns
    assert nv_pad % tile_v == 0
    np_pad = _round_up(max(np_real, 1), tile_p)

    # pad features to lane-dense channel width / tile-aligned row counts once
    xF = _pad_rows(_pad_cols(xF), nv_pad)
    zF = _pad_rows(_pad_cols(zF), np_pad)
    # padded points get a sentinel index == nv_pad: matches no one-hot column,
    # so they contribute nothing to the scatter.
    p2v_pad = jnp.concatenate(
        [p2v.astype(jnp.int32),
         jnp.full((np_pad - np_real,), nv_pad, jnp.int32)])
    idx_col = p2v_pad[:, None]                     # [Np_pad, 1]
    idx_row = p2v_pad[None, :]                     # [1, Np_pad]

    saved = []
    # -- Voxel branch: for block in self.downs: x = block(x, emb)
    for blk in params["downs"]:
        ni = blk["ni"]
        # hoisted emb projection -> (scale, shift), tiny [1, 2*ni] XLA op
        eproj = jnp.dot(_silu(emb), blk["wemb"]) + blk["bemb"]
        scale = _pad_cols(eproj[:, :ni])
        shift = _pad_cols(eproj[:, ni:])
        res, xF = downblock_call(xF, scale, shift,
                                 blk["w1"], blk["b1"], blk["w2"], blk["b2"],
                                 blk["wd"], blk["bd"], tile_n=tile_v)
        # saved(...) wrappers record the resnet output and the down output
        saved += [res, xF]

    # -- Point branch (fused): z1 = voxel_to_point(x, z); z1 = point_block(z1, z);
    #    x = point_to_voxel(x, z1)
    pb = params["point_block"]
    # TODO(synk): BatchNorm1d in eval mode with synthetic running stats.
    bn_scale = pb["gamma"] * jax.lax.rsqrt(pb["var"] + 1e-5)
    bn_bias = pb["beta"] - pb["mean"] * bn_scale
    counts = jnp.maximum(jnp.bincount(p2v.astype(jnp.int32), length=nv_pad), 1
                         ).astype(jnp.float32)[:, None]

    z1F, xF = point_branch_call(zF, idx_col, idx_row, xF,
                                _pad_cols(bn_scale), _pad_cols(bn_bias),
                                pb["w"], pb["b"], counts, tile_p=tile_p)
    return xF, z1F, saved


if __name__ == "__main__":
    key = jax.random.PRNGKey(0)
    n_emb = 64
    nfs = (32, 64, 128)        # module default channel schedule
    Np, Nv = 256, 128          # small demo sizes (points / voxels)

    kx, kz, ke, kp = jax.random.split(key, 4)
    xF = jax.random.normal(kx, (Nv, nfs[0]), jnp.float32)   # voxel features x.F
    zF = jax.random.normal(kz, (Np, nfs[0]), jnp.float32)   # point features z.F
    emb = jax.random.normal(ke, (1, n_emb), jnp.float32)    # timestep embedding
    # point -> nearest-voxel index map
    p2v = jax.random.randint(kp, (Np,), 0, Nv, dtype=jnp.int32)

    params = init_spv_down_stage_params(jax.random.PRNGKey(42), n_emb, nfs)
    xF_out, z1F_out, saved = spv_down_stage_forward(params, xF, zF, emb, p2v, Nv)
    jax.block_until_ready((xF_out, z1F_out, saved))

    # slice back to the true row/channel extents (padded internally)
    xF_out = xF_out[:Nv, :nfs[-1]]
    z1F_out = z1F_out[:Np, :nfs[-1]]
    assert xF_out.shape == (Nv, nfs[-1]), xF_out.shape
    assert z1F_out.shape == (Np, nfs[-1]), z1F_out.shape
    assert len(saved) == 2 * (len(nfs) - 1), len(saved)
    assert bool(jnp.all(jnp.isfinite(xF_out)))
    assert bool(jnp.all(jnp.isfinite(z1F_out)))
    print("KERNEL_OK")
</pallas_src>

<mosaic_0001>
module attributes {stable_mosaic.version = 11 : i64} {
  func.func @downblock_kernel(%arg0: i32, %arg1: memref<128x128xf32, #tpu.memory_space<vmem>>, %arg2: memref<1x128xf32, #tpu.memory_space<vmem>>, %arg3: memref<1x128xf32, #tpu.memory_space<vmem>>, %arg4: memref<128x128xbf16, #tpu.memory_space<vmem>>, %arg5: memref<1x128xf32, #tpu.memory_space<vmem>>, %arg6: memref<128x128xbf16, #tpu.memory_space<vmem>>, %arg7: memref<1x128xf32, #tpu.memory_space<vmem>>, %arg8: memref<128x128xbf16, #tpu.memory_space<vmem>>, %arg9: memref<1x128xf32, #tpu.memory_space<vmem>>, %arg10: memref<128x128xf32, #tpu.memory_space<vmem>>, %arg11: memref<128x128xf32, #tpu.memory_space<vmem>>) attributes {dimension_semantics = [#tpu.dimension_semantics<parallel>], iteration_bounds = array<i64: 1>, scalar_prefetch = 0 : i64, scratch_operands = 0 : i64, tpu.core_type = #tpu.core_type<tc>, window_params = [{transform_indices = @transform_0, window_bounds = array<i64: 128, 128>}, {pipeline_mode = #tpu.pipeline_mode<synchronous>, transform_indices = @transform_1, window_bounds = array<i64: 1, 128>}, {pipeline_mode = #tpu.pipeline_mode<synchronous>, transform_indices = @transform_2, window_bounds = array<i64: 1, 128>}, {pipeline_mode = #tpu.pipeline_mode<synchronous>, transform_indices = @transform_3, window_bounds = array<i64: 128, 128>}, {pipeline_mode = #tpu.pipeline_mode<synchronous>, transform_indices = @transform_4, window_bounds = array<i64: 1, 128>}, {pipeline_mode = #tpu.pipeline_mode<synchronous>, transform_indices = @transform_5, window_bounds = array<i64: 128, 128>}, {pipeline_mode = #tpu.pipeline_mode<synchronous>, transform_indices = @transform_6, window_bounds = array<i64: 1, 128>}, {pipeline_mode = #tpu.pipeline_mode<synchronous>, transform_indices = @transform_7, window_bounds = array<i64: 128, 128>}, {pipeline_mode = #tpu.pipeline_mode<synchronous>, transform_indices = @transform_8, window_bounds = array<i64: 1, 128>}, {transform_indices = @transform_9, window_bounds = array<i64: 128, 128>}, {transform_indices = @transform_10, window_bounds = array<i64: 128, 128>}]} {
    %c0 = arith.constant 0 : index
    %c0_0 = arith.constant 0 : index
    %0 = vector.load %arg1[%c0, %c0_0] : memref<128x128xf32, #tpu.memory_space<vmem>>, vector<128x128xf32>
    %1 = arith.negf %0 : vector<128x128xf32>
    %2 = math.exp %1 : vector<128x128xf32>
    %cst = arith.constant 1.000000e+00 : f32
    %3 = vector.broadcast %cst : f32 to vector<128x128xf32>
    %4 = arith.addf %3, %2 : vector<128x128xf32>
    %5 = arith.divf %3, %4 : vector<128x128xf32>
    %6 = arith.mulf %0, %5 : vector<128x128xf32>
    %7 = arith.truncf %6 : vector<128x128xf32> to vector<128x128xbf16>
    %c0_1 = arith.constant 0 : index
    %c0_2 = arith.constant 0 : index
    %8 = vector.load %arg4[%c0_1, %c0_2] : memref<128x128xbf16, #tpu.memory_space<vmem>>, vector<128x128xbf16>
    %cst_3 = arith.constant dense<0.000000e+00> : vector<128x128xf32>
    %9 = tpu.matmul %7, %8, %cst_3 {dimension_numbers = #tpu.dot_dimension_numbers<[1], [0], [0], [1], [0, 0, 1, 1], [], []>} : vector<128x128xbf16>, vector<128x128xbf16>, vector<128x128xf32> -> vector<128x128xf32>
    %c0_4 = arith.constant 0 : index
    %c0_5 = arith.constant 0 : index
    %10 = vector.load %arg5[%c0_4, %c0_5] : memref<1x128xf32, #tpu.memory_space<vmem>>, vector<1x128xf32>
    %11 = vector.broadcast %10 : vector<1x128xf32> to vector<128x128xf32>
    %12 = arith.addf %9, %11 : vector<128x128xf32>
    %c0_6 = arith.constant 0 : index
    %c0_7 = arith.constant 0 : index
    %13 = vector.load %arg2[%c0_6, %c0_7] : memref<1x128xf32, #tpu.memory_space<vmem>>, vector<1x128xf32>
    %cst_8 = arith.constant 1.000000e+00 : f32
    %14 = vector.broadcast %cst_8 : f32 to vector<1x128xf32>
    %15 = arith.addf %14, %13 : vector<1x128xf32>
    %16 = vector.broadcast %15 : vector<1x128xf32> to vector<128x128xf32>
    %17 = arith.mulf %12, %16 : vector<128x128xf32>
    %c0_9 = arith.constant 0 : index
    %c0_10 = arith.constant 0 : index
    %18 = vector.load %arg3[%c0_9, %c0_10] : memref<1x128xf32, #tpu.memory_space<vmem>>, vector<1x128xf32>
    %19 = vector.broadcast %18 : vector<1x128xf32> to vector<128x128xf32>
    %20 = arith.addf %17, %19 : vector<128x128xf32>
    %21 = arith.negf %20 : vector<128x128xf32>
    %22 = math.exp %21 : vector<128x128xf32>
    %cst_11 = arith.constant 1.000000e+00 : f32
    %23 = vector.broadcast %cst_11 : f32 to vector<128x128xf32>
    %24 = arith.addf %23, %22 : vector<128x128xf32>
    %25 = arith.divf %23, %24 : vector<128x128xf32>
    %26 = arith.mulf %20, %25 : vector<128x128xf32>
    %27 = arith.truncf %26 : vector<128x128xf32> to vector<128x128xbf16>
    %c0_12 = arith.constant 0 : index
    %c0_13 = arith.constant 0 : index
    %28 = vector.load %arg6[%c0_12, %c0_13] : memref<128x128xbf16, #tpu.memory_space<vmem>>, vector<128x128xbf16>
    %cst_14 = arith.constant dense<0.000000e+00> : vector<128x128xf32>
    %29 = tpu.matmul %27, %28, %cst_14 {dimension_numbers = #tpu.dot_dimension_numbers<[1], [0], [0], [1], [0, 0, 1, 1], [], []>} : vector<128x128xbf16>, vector<128x128xbf16>, vector<128x128xf32> -> vector<128x128xf32>
    %c0_15 = arith.constant 0 : index
    %c0_16 = arith.constant 0 : index
    %30 = vector.load %arg7[%c0_15, %c0_16] : memref<1x128xf32, #tpu.memory_space<vmem>>, vector<1x128xf32>
    %31 = vector.broadcast %30 : vector<1x128xf32> to vector<128x128xf32>
    %32 = arith.addf %29, %31 : vector<128x128xf32>
    %33 = arith.addf %0, %32 : vector<128x128xf32>
    %c0_17 = arith.constant 0 : index
    %c0_18 = arith.constant 0 : index
    %34 = vector.load %arg10[%c0_17, %c0_18] : memref<128x128xf32, #tpu.memory_space<vmem>>, vector<128x128xf32>
    tpu.vector_store %arg10[%c0_17, %c0_18], %33 {strides = array<i32>} : memref<128x128xf32, #tpu.memory_space<vmem>>, vector<128x128xf32>,
    %35 = arith.truncf %33 : vector<128x128xf32> to vector<128x128xbf16>
    %c0_19 = arith.constant 0 : index
    %c0_20 = arith.constant 0 : index
    %36 = vector.load %arg8[%c0_19, %c0_20] : memref<128x128xbf16, #tpu.memory_space<vmem>>, vector<128x128xbf16>
    %cst_21 = arith.constant dense<0.000000e+00> : vector<128x128xf32>
    %37 = tpu.matmul %35, %36, %cst_21 {dimension_numbers = #tpu.dot_dimension_numbers<[1], [0], [0], [1], [0, 0, 1, 1], [], []>} : vector<128x128xbf16>, vector<128x128xbf16>, vector<128x128xf32> -> vector<128x128xf32>
    %c0_22 = arith.constant 0 : index
    %c0_23 = arith.constant 0 : index
    %38 = vector.load %arg9[%c0_22, %c0_23] : memref<1x128xf32, #tpu.memory_space<vmem>>, vector<1x128xf32>
    %39 = vector.broadcast %38 : vector<1x128xf32> to vector<128x128xf32>
    %40 = arith.addf %37, %39 : vector<128x128xf32>
    %c0_24 = arith.constant 0 : index
    %c0_25 = arith.constant 0 : index
    %41 = vector.load %arg11[%c0_24, %c0_25] : memref<128x128xf32, #tpu.memory_space<vmem>>, vector<128x128xf32>
    tpu.vector_store %arg11[%c0_24, %c0_25], %40 {strides = array<i32>} : memref<128x128xf32, #tpu.memory_space<vmem>>, vector<128x128xf32>,
    return
  }
  func.func @transform_0(%arg0: i32) -> (i32, i32) {
    %c0_i32 = arith.constant 0 : i32
    %c0_i32_0 = arith.constant 0 : i32
    return %arg0, %c0_i32 : i32, i32
  }
  func.func @transform_1(%arg0: i32) -> (i32, i32) {
    %c0_i32 = arith.constant 0 : i32
    %c0_i32_0 = arith.constant 0 : i32
    %c0_i32_1 = arith.constant 0 : i32
    return %c0_i32, %c0_i32_0 : i32, i32
  }
  func.func @transform_2(%arg0: i32) -> (i32, i32) {
    %c0_i32 = arith.constant 0 : i32
    %c0_i32_0 = arith.constant 0 : i32
    %c0_i32_1 = arith.constant 0 : i32
    return %c0_i32, %c0_i32_0 : i32, i32
  }
  func.func @transform_3(%arg0: i32) -> (i32, i32) {
    %c0_i32 = arith.constant 0 : i32
    %c0_i32_0 = arith.constant 0 : i32
    %c0_i32_1 = arith.constant 0 : i32
    return %c0_i32, %c0_i32_0 : i32, i32
  }
  func.func @transform_4(%arg0: i32) -> (i32, i32) {
    %c0_i32 = arith.constant 0 : i32
    %c0_i32_0 = arith.constant 0 : i32
    %c0_i32_1 = arith.constant 0 : i32
    return %c0_i32, %c0_i32_0 : i32, i32
  }
  func.func @transform_5(%arg0: i32) -> (i32, i32) {
    %c0_i32 = arith.constant 0 : i32
    %c0_i32_0 = arith.constant 0 : i32
    %c0_i32_1 = arith.constant 0 : i32
    return %c0_i32, %c0_i32_0 : i32, i32
  }
  func.func @transform_6(%arg0: i32) -> (i32, i32) {
    %c0_i32 = arith.constant 0 : i32
    %c0_i32_0 = arith.constant 0 : i32
    %c0_i32_1 = arith.constant 0 : i32
    return %c0_i32, %c0_i32_0 : i32, i32
  }
  func.func @transform_7(%arg0: i32) -> (i32, i32) {
    %c0_i32 = arith.constant 0 : i32
    %c0_i32_0 = arith.constant 0 : i32
    %c0_i32_1 = arith.constant 0 : i32
    return %c0_i32, %c0_i32_0 : i32, i32
  }
  func.func @transform_8(%arg0: i32) -> (i32, i32) {
    %c0_i32 = arith.constant 0 : i32
    %c0_i32_0 = arith.constant 0 : i32
    %c0_i32_1 = arith.constant 0 : i32
    return %c0_i32, %c0_i32_0 : i32, i32
  }
  func.func @transform_9(%arg0: i32) -> (i32, i32) {
    %c0_i32 = arith.constant 0 : i32
    %c0_i32_0 = arith.constant 0 : i32
    return %arg0, %c0_i32 : i32, i32
  }
  func.func @transform_10(%arg0: i32) -> (i32, i32) {
    %c0_i32 = arith.constant 0 : i32
    %c0_i32_0 = arith.constant 0 : i32
    return %arg0, %c0_i32 : i32, i32
  }
}

</mosaic_0001>

<llo_original>
// kernel: tpu_custom_call.1
$region0: #{tpu_custom_call.1}
  #allocation0 [shape = 'u32[]', space=smem, size = 0x4, offset = 0x4, fixed_abs, tag = 'smem constant byte address 0x4 - core index']
  #allocation1 [shape = 'u32[144,128]{1,0:T(1,128)}', space=vmem, size = 0x12000, scoped, tag = 'internal scratch']
  %s0 = inlined_call_operand.hbm [shape: f32[128,128], index: 0, kind: input, shape index: {}]
  %s1 = inlined_call_operand.vmem [shape: f32[1,128], index: 1, kind: input, shape index: {}]
  %s2 = inlined_call_operand.vmem [shape: f32[1,128], index: 2, kind: input, shape index: {}]
  %s3 = inlined_call_operand.hbm [shape: bf16[128,128], index: 3, kind: input, shape index: {}]
  %s4 = inlined_call_operand.vmem [shape: f32[1,128], index: 4, kind: input, shape index: {}]
  %s5 = inlined_call_operand.hbm [shape: bf16[128,128], index: 5, kind: input, shape index: {}]
  %s6 = inlined_call_operand.vmem [shape: f32[1,128], index: 6, kind: input, shape index: {}]
  %s7 = inlined_call_operand.hbm [shape: bf16[128,128], index: 7, kind: input, shape index: {}]
  %s8 = inlined_call_operand.vmem [shape: f32[1,128], index: 8, kind: input, shape index: {}]
  %s9 = inlined_call_operand.hbm [shape: f32[128,128], index: 9, kind: output, shape index: {0}]
  %s10 = inlined_call_operand.hbm [shape: f32[128,128], index: 10, kind: output, shape index: {1}]
  %11 = xla_tuple %s9, %s10
  %s12 = sld [smem:[#allocation0]]
  $region70: #{tpu_custom_call.1} parent=0
    _
  %s14 = ssub.s32 1, %s12
  %s15 = scalar_select 0, %s14, %s12
  $region1: #{tpu_custom_call.1} parent=0
    #allocation2 [shape = 'u8[65536]{0}', space=vmem, size = 0x10000, scoped, tag = 'input window, operand 0, single buffered']
    #allocation3 [shape = 's32[1]{0}', space=sflag, size = 0x4, scoped, tag = 'scoped memory for tpu_custom_call.1']
    #allocation4 [shape = 's32[1]{0}', space=sflag, size = 0x4, scoped, tag = 'scoped memory for tpu_custom_call.1']
    #allocation5 [shape = 'u8[32768]{0}', space=vmem, size = 0x8000, scoped, tag = 'input window, operand 3, single buffered']
    #allocation6 [shape = 's32[1]{0}', space=sflag, size = 0x4, scoped, tag = 'scoped memory for tpu_custom_call.1']
    #allocation7 [shape = 'u8[32768]{0}', space=vmem, size = 0x8000, scoped, tag = 'input window, operand 5, single buffered']
    #allocation8 [shape = 'u8[32768]{0}', space=vmem, size = 0x8000, scoped, tag = 'input window, operand 7, single buffered']
    #allocation9 [shape = 's32[1]{0}', space=sflag, size = 0x4, scoped, tag = 'scoped memory for tpu_custom_call.1']
    #allocation10 [shape = 'u8[65536]{0}', space=vmem, size = 0x10000, scoped, tag = 'output window, operand 0, single buffered']
    #allocation11 [shape = 'u8[65536]{0}', space=vmem, size = 0x10000, scoped, tag = 'output window, operand 1, single buffered']
    #allocation12 [shape = 's32[1]{0}', space=sflag, size = 0x4, scoped, tag = 'scoped memory for tpu_custom_call.1']
    %16 = vsyncpa [#allocation3], 0
    %17 = vsyncpa [#allocation6], 0
    %18 = vsyncpa [#allocation9], 0
    %19 = vsyncpa [#allocation4], 0
    %20 = vsyncpa [#allocation12], 0
    // Predicated region
    $region2: #{tpu_custom_call.1} parent=1 // pred_check
      _
    $region3: #{tpu_custom_call.1} parent=1 // pred_check_branch
      %22 = sbr.rel (0) target = $region5
    $region4: #{tpu_custom_call.1} parent=1 // pred_region
      %s24 = ssub.s32 2048, 2048
      %25 = vsyncadd [#allocation3], %s24
      %s26 = sshll.u32 [#allocation2], 4
      %s27 = int_to_ptr.vmem [resolvable:$true] %s26
      %32 = dma.hbm_to_vmem [thread:$0]  %s0, 2048, %s27, [#allocation3], 128, 128, 8
    $region5: #{tpu_custom_call.1} parent=1 // pred_fallthru
      _
    // Predicated region
    $region6: #{tpu_custom_call.1} parent=1 // pred_check
      _
    $region7: #{tpu_custom_call.1} parent=1 // pred_check_branch
      %34 = sbr.rel (0) target = $region9
    $region8: #{tpu_custom_call.1} parent=1 // pred_region
      _
    $region9: #{tpu_custom_call.1} parent=1 // pred_fallthru
      _
    // Predicated region
    $region10: #{tpu_custom_call.1} parent=1 // pred_check
      _
    $region11: #{tpu_custom_call.1} parent=1 // pred_check_branch
      %36 = sbr.rel (0) target = $region13
    $region12: #{tpu_custom_call.1} parent=1 // pred_region
      _
    $region13: #{tpu_custom_call.1} parent=1 // pred_fallthru
      _
    // Predicated region
    $region14: #{tpu_custom_call.1} parent=1 // pred_check
      _
    $region15: #{tpu_custom_call.1} parent=1 // pred_check_branch
      %38 = sbr.rel (0) target = $region17
    $region16: #{tpu_custom_call.1} parent=1 // pred_region
      %s40 = ssub.s32 1024, 1024
      %41 = vsyncadd [#allocation6], %s40
      %s42 = sshll.u32 [#allocation5], 4
      %s43 = int_to_ptr.vmem [resolvable:$true] %s42
      %48 = dma.hbm_to_vmem [thread:$0]  %s3, 1024, %s43, [#allocation6], 64, 64, 4
    $region17: #{tpu_custom_call.1} parent=1 // pred_fallthru
      _
    // Predicated region
    $region18: #{tpu_custom_call.1} parent=1 // pred_check
      _
    $region19: #{tpu_custom_call.1} parent=1 // pred_check_branch
      %50 = sbr.rel (0) target = $region21
    $region20: #{tpu_custom_call.1} parent=1 // pred_region
      _
    $region21: #{tpu_custom_call.1} parent=1 // pred_fallthru
      _
    // Predicated region
    $region22: #{tpu_custom_call.1} parent=1 // pred_check
      _
    $region23: #{tpu_custom_call.1} parent=1 // pred_check_branch
      %52 = sbr.rel (0) target = $region25
    $region24: #{tpu_custom_call.1} parent=1 // pred_region
      %s54 = ssub.s32 1024, 1024
      %55 = vsyncadd [#allocation6], %s54
      %s56 = sshll.u32 [#allocation7], 4
      %s57 = int_to_ptr.vmem [resolvable:$true] %s56
      %62 = dma.hbm_to_vmem [thread:$0]  %s5, 1024, %s57, [#allocation6], 64, 64, 4
    $region25: #{tpu_custom_call.1} parent=1 // pred_fallthru
      _
    // Predicated region
    $region26: #{tpu_custom_call.1} parent=1 // pred_check
      _
    $region27: #{tpu_custom_call.1} parent=1 // pred_check_branch
      %64 = sbr.rel (0) target = $region29
    $region28: #{tpu_custom_call.1} parent=1 // pred_region
      _
    $region29: #{tpu_custom_call.1} parent=1 // pred_fallthru
      _
    // Predicated region
    $region30: #{tpu_custom_call.1} parent=1 // pred_check
      _
    $region31: #{tpu_custom_call.1} parent=1 // pred_check_branch
      %66 = sbr.rel (0) target = $region33
    $region32: #{tpu_custom_call.1} parent=1 // pred_region
      %s68 = ssub.s32 1024, 1024
      %69 = vsyncadd [#allocation9], %s68
      %s70 = sshll.u32 [#allocation8], 4
      %s71 = int_to_ptr.vmem [resolvable:$true] %s70
      %76 = dma.hbm_to_vmem [thread:$0]  %s7, 1024, %s71, [#allocation9], 64, 64, 4
    $region33: #{tpu_custom_call.1} parent=1 // pred_fallthru
      _
    // Predicated region
    $region34: #{tpu_custom_call.1} parent=1 // pred_check
      _
    $region35: #{tpu_custom_call.1} parent=1 // pred_check_branch
      %78 = sbr.rel (0) target = $region37
    $region36: #{tpu_custom_call.1} parent=1 // pred_region
      _
    $region37: #{tpu_custom_call.1} parent=1 // pred_fallthru
      _
    // Predicated region
    $region38: #{tpu_custom_call.1} parent=1 // pred_check
      _
    $region39: #{tpu_custom_call.1} parent=1 // pred_check_branch
      %80 = sbr.rel (0) target = $region41
    $region40: #{tpu_custom_call.1} parent=1 // pred_region
      %81 = dma.done [#allocation3], 2048
    $region41: #{tpu_custom_call.1} parent=1 // pred_fallthru
      _
    // Predicated region
    $region42: #{tpu_custom_call.1} parent=1 // pred_check
      _
    $region43: #{tpu_custom_call.1} parent=1 // pred_check_branch
      %83 = sbr.rel (0) target = $region45
    $region44: #{tpu_custom_call.1} parent=1 // pred_region
      %84 = dma.done [#allocation6], 1024
    $region45: #{tpu_custom_call.1} parent=1 // pred_fallthru
      _
    // Predicated region
    $region46: #{tpu_custom_call.1} parent=1 // pred_check
      _
    $region47: #{tpu_custom_call.1} parent=1 // pred_check_branch
      %86 = sbr.rel (0) target = $region49
    $region48: #{tpu_custom_call.1} parent=1 // pred_region
      %87 = dma.done [#allocation6], 1024
    $region49: #{tpu_custom_call.1} parent=1 // pred_fallthru
      _
    // Predicated region
    $region50: #{tpu_custom_call.1} parent=1 // pred_check
      _
    $region51: #{tpu_custom_call.1} parent=1 // pred_check_branch
      %89 = sbr.rel (0) target = $region53
    $region52: #{tpu_custom_call.1} parent=1 // pred_region
      %90 = dma.done [#allocation9], 1024
    $region53: #{tpu_custom_call.1} parent=1 // pred_fallthru
      _
    %v92 = vld [vmem:[#allocation2] sm:$0xff]
    %v93 = vld [vmem:[#allocation2 + $0x8] sm:$0xff]
    %v94 = vld [vmem:[#allocation2 + $0x10] sm:$0xff]
    %v95 = vld [vmem:[#allocation2 + $0x18] sm:$0xff]
    %v96 = vld [vmem:[#allocation2 + $0x20] sm:$0xff]
    %v97 = vld [vmem:[#allocation2 + $0x28] sm:$0xff]
    %v98 = vld [vmem:[#allocation2 + $0x30] sm:$0xff]
    %v99 = vld [vmem:[#allocation2 + $0x38] sm:$0xff]
    %v100 = vld [vmem:[#allocation2 + $0x40] sm:$0xff]
    %v101 = vld [vmem:[#allocation2 + $0x48] sm:$0xff]
    %v102 = vld [vmem:[#allocation2 + $0x50] sm:$0xff]
    %v103 = vld [vmem:[#allocation2 + $0x58] sm:$0xff]
    %v104 = vld [vmem:[#allocation2 + $0x60] sm:$0xff]
    %v105 = vld [vmem:[#allocation2 + $0x68] sm:$0xff]
    %v106 = vld [vmem:[#allocation2 + $0x70] sm:$0xff]
    %v107 = vld [vmem:[#allocation2 + $0x78] sm:$0xff]
    %v108 = vxor.u32 %v92, 2147483648
    %v109 = vxor.u32 %v93, 2147483648
    %v110 = vxor.u32 %v94, 2147483648
    %v111 = vxor.u32 %v95, 2147483648
    %v112 = vxor.u32 %v96, 2147483648
    %v113 = vxor.u32 %v97, 2147483648
    %v114 = vxor.u32 %v98, 2147483648
    %v115 = vxor.u32 %v99, 2147483648
    %v116 = vxor.u32 %v100, 2147483648
    %v117 = vxor.u32 %v101, 2147483648
    %v118 = vxor.u32 %v102, 2147483648
    %v119 = vxor.u32 %v103, 2147483648
    %v120 = vxor.u32 %v104, 2147483648
    %v121 = vxor.u32 %v105, 2147483648
    %v122 = vxor.u32 %v106, 2147483648
    %v123 = vxor.u32 %v107, 2147483648
    %v124 = vmul.f32 %v108, 1.442695
    %v125 = vpow.pop %v124
    %v126 = vmul.f32 %v109, 1.442695
    %v127 = vpow.pop %v126
    %v128 = vmul.f32 %v110, 1.442695
    %v129 = vpow.pop %v128
    %v130 = vmul.f32 %v111, 1.442695
    %v131 = vpow.pop %v130
    %v132 = vmul.f32 %v112, 1.442695
    %v133 = vpow.pop %v132
    %v134 = vmul.f32 %v113, 1.442695
    %v135 = vpow.pop %v134
    %v136 = vmul.f32 %v114, 1.442695
    %v137 = vpow.pop %v136
    %v138 = vmul.f32 %v115, 1.442695
    %v139 = vpow.pop %v138
    %v140 = vmul.f32 %v116, 1.442695
    %v141 = vpow.pop %v140
    %v142 = vmul.f32 %v117, 1.442695
    %v143 = vpow.pop %v142
    %v144 = vmul.f32 %v118, 1.442695
    %v145 = vpow.pop %v144
    %v146 = vmul.f32 %v119, 1.442695
    %v147 = vpow.pop %v146
    %v148 = vmul.f32 %v120, 1.442695
    %v149 = vpow.pop %v148
    %v150 = vmul.f32 %v121, 1.442695
    %v151 = vpow.pop %v150
    %v152 = vmul.f32 %v122, 1.442695
    %v153 = vpow.pop %v152
    %v154 = vmul.f32 %v123, 1.442695
    %v155 = vpow.pop %v154
    %v156 = vadd.f32 %v125, 1.0
    %v157 = vadd.f32 %v127, 1.0
    %v158 = vadd.f32 %v129, 1.0
    %v159 = vadd.f32 %v131, 1.0
    %v160 = vadd.f32 %v133, 1.0
    %v161 = vadd.f32 %v135, 1.0
    %v162 = vadd.f32 %v137, 1.0
    %v163 = vadd.f32 %v139, 1.0
    %v164 = vadd.f32 %v141, 1.0
    %v165 = vadd.f32 %v143, 1.0
    %v166 = vadd.f32 %v145, 1.0
    %v167 = vadd.f32 %v147, 1.0
    %v168 = vadd.f32 %v149, 1.0
    %v169 = vadd.f32 %v151, 1.0
    %v170 = vadd.f32 %v153, 1.0
    %v171 = vadd.f32 %v155, 1.0
    %v172 = vrcp.pop %v156
    %v173 = vmul.f32 1.0, %v172
    %v174 = vrcp.pop %v157
    %v175 = vmul.f32 1.0, %v174
    %v176 = vrcp.pop %v158
    %v177 = vmul.f32 1.0, %v176
    %v178 = vrcp.pop %v159
    %v179 = vmul.f32 1.0, %v178
    %v180 = vrcp.pop %v160
    %v181 = vmul.f32 1.0, %v180
    %v182 = vrcp.pop %v161
    %v183 = vmul.f32 1.0, %v182
    %v184 = vrcp.pop %v162
    %v185 = vmul.f32 1.0, %v184
    %v186 = vrcp.pop %v163
    %v187 = vmul.f32 1.0, %v186
    %v188 = vrcp.pop %v164
    %v189 = vmul.f32 1.0, %v188
    %v190 = vrcp.pop %v165
    %v191 = vmul.f32 1.0, %v190
    %v192 = vrcp.pop %v166
    %v193 = vmul.f32 1.0, %v192
    %v194 = vrcp.pop %v167
    %v195 = vmul.f32 1.0, %v194
    %v196 = vrcp.pop %v168
    %v197 = vmul.f32 1.0, %v196
    %v198 = vrcp.pop %v169
    %v199 = vmul.f32 1.0, %v198
    %v200 = vrcp.pop %v170
    %v201 = vmul.f32 1.0, %v200
    %v202 = vrcp.pop %v171
    %v203 = vmul.f32 1.0, %v202
    %v204 = vmul.f32 %v92, %v173
    %v205 = vmul.f32 %v93, %v175
    %v206 = vmul.f32 %v94, %v177
    %v207 = vmul.f32 %v95, %v179
    %v208 = vmul.f32 %v96, %v181
    %v209 = vmul.f32 %v97, %v183
    %v210 = vmul.f32 %v98, %v185
    %v211 = vmul.f32 %v99, %v187
    %v212 = vmul.f32 %v100, %v189
    %v213 = vmul.f32 %v101, %v191
    %v214 = vmul.f32 %v102, %v193
    %v215 = vmul.f32 %v103, %v195
    %v216 = vmul.f32 %v104, %v197
    %v217 = vmul.f32 %v105, %v199
    %v218 = vmul.f32 %v106, %v201
    %v219 = vmul.f32 %v107, %v203
    %v220 = vpack.c.bf16 %v205, %v204
    %v221 = vpack.c.bf16 %v207, %v206
    %v222 = vpack.c.bf16 %v209, %v208
    %v223 = vpack.c.bf16 %v211, %v210
    %v224 = vpack.c.bf16 %v213, %v212
    %v225 = vpack.c.bf16 %v215, %v214
    %v226 = vpack.c.bf16 %v217, %v216
    %v227 = vpack.c.bf16 %v219, %v218
    %v228 = vld [vmem:[#allocation5] sm:$0xf]
    %v229 = vld [vmem:[#allocation5 + $0x4] sm:$0xf]
    %v230 = vld [vmem:[#allocation5 + $0x8] sm:$0xf]
    %v231 = vld [vmem:[#allocation5 + $0xc] sm:$0xf]
    %v232 = vld [vmem:[#allocation5 + $0x10] sm:$0xf]
    %v233 = vld [vmem:[#allocation5 + $0x14] sm:$0xf]
    %v234 = vld [vmem:[#allocation5 + $0x18] sm:$0xf]
    %v235 = vld [vmem:[#allocation5 + $0x1c] sm:$0xf]
    %v236 = vld [vmem:[#allocation5 + $0x20] sm:$0xf]
    %v237 = vld [vmem:[#allocation5 + $0x24] sm:$0xf]
    %v238 = vld [vmem:[#allocation5 + $0x28] sm:$0xf]
    %v239 = vld [vmem:[#allocation5 + $0x2c] sm:$0xf]
    %v240 = vld [vmem:[#allocation5 + $0x30] sm:$0xf]
    %v241 = vld [vmem:[#allocation5 + $0x34] sm:$0xf]
    %v242 = vld [vmem:[#allocation5 + $0x38] sm:$0xf]
    %v243 = vld [vmem:[#allocation5 + $0x3c] sm:$0xf]
    %v244 = vld [vmem:[%s4] sm:$0x1]
    %v246 = vlaneseq
    %v247 = vshrl.u32 %v246, 7
    %v248 = vsub.s32 0, %v247
    %v249 = vrot.slane %v244, %v248
    %v267 = vunpack.c.l.b16 %v228
    %v268 = vunpack.c.l.b16 %v229
    %v269 = vunpack.c.l.b16 %v230
    %v270 = vunpack.c.l.b16 %v231
    %v271 = vunpack.c.l.b16 %v232
    %v272 = vunpack.c.l.b16 %v233
    %v273 = vunpack.c.l.b16 %v234
    %v274 = vunpack.c.l.b16 %v235
    %v275 = vunpack.c.l.b16 %v236
    %v276 = vunpack.c.l.b16 %v237
    %v277 = vunpack.c.l.b16 %v238
    %v278 = vunpack.c.l.b16 %v239
    %v279 = vunpack.c.l.b16 %v240
    %v280 = vunpack.c.l.b16 %v241
    %v281 = vunpack.c.l.b16 %v242
    %v282 = vunpack.c.l.b16 %v243
    %v283 = vpack.c.b16 %v268, %v267
    %v284 = vpack.c.b16 %v270, %v269
    %v285 = vpack.c.b16 %v272, %v271
    %v286 = vpack.c.b16 %v274, %v273
    %v287 = vpack.c.b16 %v276, %v275
    %v288 = vpack.c.b16 %v278, %v277
    %v289 = vpack.c.b16 %v280, %v279
    %v290 = vpack.c.b16 %v282, %v281
    %299 = vmatprep.subr.bf16.mxu0 0
    %300 = vmatpush1.bf16.msra.mxu0 %v283
    %301 = vmatprep.subr.bf16.mxu0 0
    %302 = vmatpush1.bf16.msra.mxu0 %v284
    %303 = vmatprep.subr.bf16.mxu0 0
    %304 = vmatpush1.bf16.msra.mxu0 %v285
    %305 = vmatprep.subr.bf16.mxu0 0
    %306 = vmatpush1.bf16.msra.mxu0 %v286
    %307 = vmatprep.subr.bf16.mxu0 0
    %308 = vmatpush1.bf16.msra.mxu0 %v287
    %309 = vmatprep.subr.bf16.mxu0 0
    %310 = vmatpush1.bf16.msra.mxu0 %v288
    %311 = vmatprep.subr.bf16.mxu0 0
    %312 = vmatpush1.bf16.msra.mxu0 %v289
    %313 = vmatprep.subr.bf16.mxu0 0
    %314 = vmatpush1.bf16.msra.mxu0 %v290
    %315 = vmatprep.subr.bf16.mxu0 0
    %316 = vmatpush1.bf16.msra.mxu0 0
    %317 = vmatprep.subr.bf16.mxu0 0
    %318 = vmatpush1.bf16.msra.mxu0 0
    %319 = vmatprep.subr.bf16.mxu0 0
    %320 = vmatpush1.bf16.msra.mxu0 0
    %321 = vmatprep.subr.bf16.mxu0 0
    %322 = vmatpush1.bf16.msra.mxu0 0
    %323 = vmatprep.subr.bf16.mxu0 0
    %324 = vmatpush1.bf16.msra.mxu0 0
    %325 = vmatprep.subr.bf16.mxu0 0
    %326 = vmatpush1.bf16.msra.mxu0 0
    %327 = vmatprep.subr.bf16.mxu0 0
    %328 = vmatpush1.bf16.msra.mxu0 0
    %329 = vmatprep.subr.bf16.mxu0 0
    %330 = vmatpush1.bf16.msra.mxu0 0
    %331 = vmatprep.mubr.bf16.mxu0 0
    %332 = vmatmul.mubr.bf16.gmra.mrb[0].mxu0 %v220
    %v333 = vpop.f32.mrb[0].mxu0
    %v334 = vadd.f32 %v249, %v333
    %v335 = vpop.f32.mrb[0].mxu0
    %v336 = vpop.f32.mrb[0].mxu0
    %v337 = vadd.f32 %v249, %v336
    %v338 = vpop.f32.mrb[0].mxu0
    %339 = vmatprep.mubr.bf16.mxu0 0
    %340 = vmatmul.mubr.bf16.gmra.mrb[0].mxu0 %v221
    %v341 = vpop.f32.mrb[0].mxu0
    %v342 = vadd.f32 %v249, %v341
    %v343 = vpop.f32.mrb[0].mxu0
    %v344 = vpop.f32.mrb[0].mxu0
    %v345 = vadd.f32 %v249, %v344
    %v346 = vpop.f32.mrb[0].mxu0
    %347 = vmatprep.mubr.bf16.mxu0 0
    %348 = vmatmul.mubr.bf16.gmra.mrb[0].mxu0 %v222
    %v349 = vpop.f32.mrb[0].mxu0
    %v350 = vadd.f32 %v249, %v349
    %v351 = vpop.f32.mrb[0].mxu0
    %v352 = vpop.f32.mrb[0].mxu0
    %v353 = vadd.f32 %v249, %v352
    %v354 = vpop.f32.mrb[0].mxu0
    %355 = vmatprep.mubr.bf16.mxu0 0
    %356 = vmatmul.mubr.bf16.gmra.mrb[0].mxu0 %v223
    %v357 = vpop.f32.mrb[0].mxu0
    %v358 = vadd.f32 %v249, %v357
    %v359 = vpop.f32.mrb[0].mxu0
    %v360 = vpop.f32.mrb[0].mxu0
    %v361 = vadd.f32 %v249, %v360
    %v362 = vpop.f32.mrb[0].mxu0
    %363 = vmatprep.mubr.bf16.mxu0 0
    %364 = vmatmul.mubr.bf16.gmra.mrb[0].mxu0 %v224
    %v365 = vpop.f32.mrb[0].mxu0
    %v366 = vadd.f32 %v249, %v365
    %v367 = vpop.f32.mrb[0].mxu0
    %v368 = vpop.f32.mrb[0].mxu0
    %v369 = vadd.f32 %v249, %v368
    %v370 = vpop.f32.mrb[0].mxu0
    %371 = vmatprep.mubr.bf16.mxu0 0
    %372 = vmatmul.mubr.bf16.gmra.mrb[0].mxu0 %v225
    %v373 = vpop.f32.mrb[0].mxu0
    %v374 = vadd.f32 %v249, %v373
    %v375 = vpop.f32.mrb[0].mxu0
    %v376 = vpop.f32.mrb[0].mxu0
    %v377 = vadd.f32 %v249, %v376
    %v378 = vpop.f32.mrb[0].mxu0
    %379 = vmatprep.mubr.bf16.mxu0 0
    %380 = vmatmul.mubr.bf16.gmra.mrb[0].mxu0 %v226
    %v381 = vpop.f32.mrb[0].mxu0
    %v382 = vadd.f32 %v249, %v381
    %v383 = vpop.f32.mrb[0].mxu0
    %v384 = vpop.f32.mrb[0].mxu0
    %v385 = vadd.f32 %v249, %v384
    %v386 = vpop.f32.mrb[0].mxu0
    %387 = vmatprep.mubr.bf16.mxu0 0
    %388 = vmatmul.mubr.bf16.gmra.mrb[0].mxu0 %v227
    %v389 = vpop.f32.mrb[0].mxu0
    %v390 = vadd.f32 %v249, %v389
    %v391 = vpop.f32.mrb[0].mxu0
    %v392 = vpop.f32.mrb[0].mxu0
    %v393 = vadd.f32 %v249, %v392
    %v394 = vpop.f32.mrb[0].mxu0
    %395 = vdwg.mxu0
    %v396 = vld [vmem:[%s1] sm:$0x1]
    %v397 = vadd.f32 %v396, 1.0
    %v399 = vlaneseq
    %v400 = vshrl.u32 %v399, 7
    %v401 = vsub.s32 0, %v400
    %v402 = vrot.slane %v397, %v401
    %v404 = vmul.f32 %v334, %v402
    %v405 = vmul.f32 %v337, %v402
    %v406 = vmul.f32 %v342, %v402
    %v407 = vmul.f32 %v345, %v402
    %v408 = vmul.f32 %v350, %v402
    %v409 = vmul.f32 %v353, %v402
    %v410 = vmul.f32 %v358, %v402
    %v411 = vmul.f32 %v361, %v402
    %v412 = vmul.f32 %v366, %v402
    %v413 = vmul.f32 %v369, %v402
    %v414 = vmul.f32 %v374, %v402
    %v415 = vmul.f32 %v377, %v402
    %v416 = vmul.f32 %v382, %v402
    %v417 = vmul.f32 %v385, %v402
    %v418 = vmul.f32 %v390, %v402
    %v419 = vmul.f32 %v393, %v402
    %v420 = vld [vmem:[%s2] sm:$0x1]
    %v422 = vlaneseq
    %v423 = vshrl.u32 %v422, 7
    %v424 = vsub.s32 0, %v423
    %v425 = vrot.slane %v420, %v424
    %v427 = vadd.f32 %v404, %v425
    %v428 = vadd.f32 %v405, %v425
    %v429 = vadd.f32 %v406, %v425
    %v430 = vadd.f32 %v407, %v425
    %v431 = vadd.f32 %v408, %v425
    %v432 = vadd.f32 %v409, %v425
    %v433 = vadd.f32 %v410, %v425
    %v434 = vadd.f32 %v411, %v425
    %v435 = vadd.f32 %v412, %v425
    %v436 = vadd.f32 %v413, %v425
    %v437 = vadd.f32 %v414, %v425
    %v438 = vadd.f32 %v415, %v425
    %v439 = vadd.f32 %v416, %v425
    %v440 = vadd.f32 %v417, %v425
    %v441 = vadd.f32 %v418, %v425
    %v442 = vadd.f32 %v419, %v425
    %v443 = vxor.u32 %v427, 2147483648
    %v444 = vxor.u32 %v428, 2147483648
    %v445 = vxor.u32 %v429, 2147483648
    %v446 = vxor.u32 %v430, 2147483648
    %v447 = vxor.u32 %v431, 2147483648
    %v448 = vxor.u32 %v432, 2147483648
    %v449 = vxor.u32 %v433, 2147483648
    %v450 = vxor.u32 %v434, 2147483648
    %v451 = vxor.u32 %v435, 2147483648
    %v452 = vxor.u32 %v436, 2147483648
    %v453 = vxor.u32 %v437, 2147483648
    %v454 = vxor.u32 %v438, 2147483648
    %v455 = vxor.u32 %v439, 2147483648
    %v456 = vxor.u32 %v440, 2147483648
    %v457 = vxor.u32 %v441, 2147483648
    %v458 = vxor.u32 %v442, 2147483648
    %v459 = vmul.f32 %v443, 1.442695
    %v460 = vpow.pop %v459
    %v461 = vmul.f32 %v444, 1.442695
    %v462 = vpow.pop %v461
    %v463 = vmul.f32 %v445, 1.442695
    %v464 = vpow.pop %v463
    %v465 = vmul.f32 %v446, 1.442695
    %v466 = vpow.pop %v465
    %v467 = vmul.f32 %v447, 1.442695
    %v468 = vpow.pop %v467
    %v469 = vmul.f32 %v448, 1.442695
    %v470 = vpow.pop %v469
    %v471 = vmul.f32 %v449, 1.442695
    %v472 = vpow.pop %v471
    %v473 = vmul.f32 %v450, 1.442695
    %v474 = vpow.pop %v473
    %v475 = vmul.f32 %v451, 1.442695
    %v476 = vpow.pop %v475
    %v477 = vmul.f32 %v452, 1.442695
    %v478 = vpow.pop %v477
    %v479 = vmul.f32 %v453, 1.442695
    %v480 = vpow.pop %v479
    %v481 = vmul.f32 %v454, 1.442695
    %v482 = vpow.pop %v481
    %v483 = vmul.f32 %v455, 1.442695
    %v484 = vpow.pop %v483
    %v485 = vmul.f32 %v456, 1.442695
    %v486 = vpow.pop %v485
    %v487 = vmul.f32 %v457, 1.442695
    %v488 = vpow.pop %v487
    %v489 = vmul.f32 %v458, 1.442695
    %v490 = vpow.pop %v489
    %v491 = vadd.f32 %v460, 1.0
    %v492 = vadd.f32 %v462, 1.0
    %v493 = vadd.f32 %v464, 1.0
    %v494 = vadd.f32 %v466, 1.0
    %v495 = vadd.f32 %v468, 1.0
    %v496 = vadd.f32 %v470, 1.0
    %v497 = vadd.f32 %v472, 1.0
    %v498 = vadd.f32 %v474, 1.0
    %v499 = vadd.f32 %v476, 1.0
    %v500 = vadd.f32 %v478, 1.0
    %v501 = vadd.f32 %v480, 1.0
    %v502 = vadd.f32 %v482, 1.0
    %v503 = vadd.f32 %v484, 1.0
    %v504 = vadd.f32 %v486, 1.0
    %v505 = vadd.f32 %v488, 1.0
    %v506 = vadd.f32 %v490, 1.0
    %v507 = vrcp.pop %v491
    %v508 = vmul.f32 1.0, %v507
    %v509 = vrcp.pop %v492
    %v510 = vmul.f32 1.0, %v509
    %v511 = vrcp.pop %v493
    %v512 = vmul.f32 1.0, %v511
    %v513 = vrcp.pop %v494
    %v514 = vmul.f32 1.0, %v513
    %v515 = vrcp.pop %v495
    %v516 = vmul.f32 1.0, %v515
    %v517 = vrcp.pop %v496
    %v518 = vmul.f32 1.0, %v517
    %v519 = vrcp.pop %v497
    %v520 = vmul.f32 1.0, %v519
    %v521 = vrcp.pop %v498
    %v522 = vmul.f32 1.0, %v521
    %v523 = vrcp.pop %v499
    %v524 = vmul.f32 1.0, %v523
    %v525 = vrcp.pop %v500
    %v526 = vmul.f32 1.0, %v525
    %v527 = vrcp.pop %v501
    %v528 = vmul.f32 1.0, %v527
    %v529 = vrcp.pop %v502
    %v530 = vmul.f32 1.0, %v529
    %v531 = vrcp.pop %v503
    %v532 = vmul.f32 1.0, %v531
    %v533 = vrcp.pop %v504
    %v534 = vmul.f32 1.0, %v533
    %v535 = vrcp.pop %v505
    %v536 = vmul.f32 1.0, %v535
    %v537 = vrcp.pop %v506
    %v538 = vmul.f32 1.0, %v537
    %v539 = vmul.f32 %v427, %v508
    %v540 = vmul.f32 %v428, %v510
    %v541 = vmul.f32 %v429, %v512
    %v542 = vmul.f32 %v430, %v514
    %v543 = vmul.f32 %v431, %v516
    %v544 = vmul.f32 %v432, %v518
    %v545 = vmul.f32 %v433, %v520
    %v546 = vmul.f32 %v434, %v522
    %v547 = vmul.f32 %v435, %v524
    %v548 = vmul.f32 %v436, %v526
    %v549 = vmul.f32 %v437, %v528
    %v550 = vmul.f32 %v438, %v530
    %v551 = vmul.f32 %v439, %v532
    %v552 = vmul.f32 %v440, %v534
    %v553 = vmul.f32 %v441, %v536
    %v554 = vmul.f32 %v442, %v538
    %v555 = vpack.c.bf16 %v540, %v539
    %v556 = vpack.c.bf16 %v542, %v541
    %v557 = vpack.c.bf16 %v544, %v543
    %v558 = vpack.c.bf16 %v546, %v545
    %v559 = vpack.c.bf16 %v548, %v547
    %v560 = vpack.c.bf16 %v550, %v549
    %v561 = vpack.c.bf16 %v552, %v551
    %v562 = vpack.c.bf16 %v554, %v553
    %v563 = vld [vmem:[#allocation7] sm:$0xf]
    %v564 = vld [vmem:[#allocation7 + $0x4] sm:$0xf]
    %v565 = vld [vmem:[#allocation7 + $0x8] sm:$0xf]
    %v566 = vld [vmem:[#allocation7 + $0xc] sm:$0xf]
    %v567 = vld [vmem:[#allocation7 + $0x10] sm:$0xf]
    %v568 = vld [vmem:[#allocation7 + $0x14] sm:$0xf]
    %v569 = vld [vmem:[#allocation7 + $0x18] sm:$0xf]
    %v570 = vld [vmem:[#allocation7 + $0x1c] sm:$0xf]
    %v571 = vld [vmem:[#allocation7 + $0x20] sm:$0xf]
    %v572 = vld [vmem:[#allocation7 + $0x24] sm:$0xf]
    %v573 = vld [vmem:[#allocation7 + $0x28] sm:$0xf]
    %v574 = vld [vmem:[#allocation7 + $0x2c] sm:$0xf]
    %v575 = vld [vmem:[#allocation7 + $0x30] sm:$0xf]
    %v576 = vld [vmem:[#allocation7 + $0x34] sm:$0xf]
    %v577 = vld [vmem:[#allocation7 + $0x38] sm:$0xf]
    %v578 = vld [vmem:[#allocation7 + $0x3c] sm:$0xf]
    %v579 = vld [vmem:[%s6] sm:$0x1]
    %v581 = vlaneseq
    %v582 = vshrl.u32 %v581, 7
    %v583 = vsub.s32 0, %v582
    %v584 = vrot.slane %v579, %v583
    %v602 = vunpack.c.l.b16 %v563
    %v603 = vunpack.c.l.b16 %v564
    %v604 = vunpack.c.l.b16 %v565
    %v605 = vunpack.c.l.b16 %v566
    %v606 = vunpack.c.l.b16 %v567
    %v607 = vunpack.c.l.b16 %v568
    %v608 = vunpack.c.l.b16 %v569
    %v609 = vunpack.c.l.b16 %v570
    %v610 = vunpack.c.l.b16 %v571
    %v611 = vunpack.c.l.b16 %v572
    %v612 = vunpack.c.l.b16 %v573
    %v613 = vunpack.c.l.b16 %v574
    %v614 = vunpack.c.l.b16 %v575
    %v615 = vunpack.c.l.b16 %v576
    %v616 = vunpack.c.l.b16 %v577
    %v617 = vunpack.c.l.b16 %v578
    %v618 = vpack.c.b16 %v603, %v602
    %v619 = vpack.c.b16 %v605, %v604
    %v620 = vpack.c.b16 %v607, %v606
    %v621 = vpack.c.b16 %v609, %v608
    %v622 = vpack.c.b16 %v611, %v610
    %v623 = vpack.c.b16 %v613, %v612
    %v624 = vpack.c.b16 %v615, %v614
    %v625 = vpack.c.b16 %v617, %v616
    %634 = vmatprep.subr.bf16.mxu0 0
    %635 = vmatpush1.bf16.msra.mxu0 %v618
    %636 = vmatprep.subr.bf16.mxu0 0
    %637 = vmatpush1.bf16.msra.mxu0 %v619
    %638 = vmatprep.subr.bf16.mxu0 0
    %639 = vmatpush1.bf16.msra.mxu0 %v620
    %640 = vmatprep.subr.bf16.mxu0 0
    %641 = vmatpush1.bf16.msra.mxu0 %v621
    %642 = vmatprep.subr.bf16.mxu0 0
    %643 = vmatpush1.bf16.msra.mxu0 %v622
    %644 = vmatprep.subr.bf16.mxu0 0
    %645 = vmatpush1.bf16.msra.mxu0 %v623
    %646 = vmatprep.subr.bf16.mxu0 0
    %647 = vmatpush1.bf16.msra.mxu0 %v624
    %648 = vmatprep.subr.bf16.mxu0 0
    %649 = vmatpush1.bf16.msra.mxu0 %v625
    %650 = vmatprep.subr.bf16.mxu0 0
    %651 = vmatpush1.bf16.msra.mxu0 0
    %652 = vmatprep.subr.bf16.mxu0 0
    %653 = vmatpush1.bf16.msra.mxu0 0
    %654 = vmatprep.subr.bf16.mxu0 0
    %655 = vmatpush1.bf16.msra.mxu0 0
    %656 = vmatprep.subr.bf16.mxu0 0
    %657 = vmatpush1.bf16.msra.mxu0 0
    %658 = vmatprep.subr.bf16.mxu0 0
    %659 = vmatpush1.bf16.msra.mxu0 0
    %660 = vmatprep.subr.bf16.mxu0 0
    %661 = vmatpush1.bf16.msra.mxu0 0
    %662 = vmatprep.subr.bf16.mxu0 0
    %663 = vmatpush1.bf16.msra.mxu0 0
    %664 = vmatprep.subr.bf16.mxu0 0
    %665 = vmatpush1.bf16.msra.mxu0 0
    %666 = vmatprep.mubr.bf16.mxu0 0
    %667 = vmatmul.mubr.bf16.gmra.mrb[0].mxu0 %v555
    %v668 = vpop.f32.mrb[0].mxu0
    %v669 = vadd.f32 %v584, %v668
    %v670 = vpop.f32.mrb[0].mxu0
    %v671 = vpop.f32.mrb[0].mxu0
    %v672 = vadd.f32 %v584, %v671
    %v673 = vpop.f32.mrb[0].mxu0
    %674 = vmatprep.mubr.bf16.mxu0 0
    %675 = vmatmul.mubr.bf16.gmra.mrb[0].mxu0 %v556
    %v676 = vpop.f32.mrb[0].mxu0
    %v677 = vadd.f32 %v584, %v676
    %v678 = vpop.f32.mrb[0].mxu0
    %v679 = vpop.f32.mrb[0].mxu0
    %v680 = vadd.f32 %v584, %v679
    %v681 = vpop.f32.mrb[0].mxu0
    %682 = vmatprep.mubr.bf16.mxu0 0
    %683 = vmatmul.mubr.bf16.gmra.mrb[0].mxu0 %v557
    %v684 = vpop.f32.mrb[0].mxu0
    %v685 = vadd.f32 %v584, %v684
    %v686 = vpop.f32.mrb[0].mxu0
    %v687 = vpop.f32.mrb[0].mxu0
    %v688 = vadd.f32 %v584, %v687
    %v689 = vpop.f32.mrb[0].mxu0
    %690 = vmatprep.mubr.bf16.mxu0 0
    %691 = vmatmul.mubr.bf16.gmra.mrb[0].mxu0 %v558
    %v692 = vpop.f32.mrb[0].mxu0
    %v693 = vadd.f32 %v584, %v692
    %v694 = vpop.f32.mrb[0].mxu0
    %v695 = vpop.f32.mrb[0].mxu0
    %v696 = vadd.f32 %v584, %v695
    %v697 = vpop.f32.mrb[0].mxu0
    %698 = vmatprep.mubr.bf16.mxu0 0
    %699 = vmatmul.mubr.bf16.gmra.mrb[0].mxu0 %v559
    %v700 = vpop.f32.mrb[0].mxu0
    %v701 = vadd.f32 %v584, %v700
    %v702 = vpop.f32.mrb[0].mxu0
    %v703 = vpop.f32.mrb[0].mxu0
    %v704 = vadd.f32 %v584, %v703
    %v705 = vpop.f32.mrb[0].mxu0
    %706 = vmatprep.mubr.bf16.mxu0 0
    %707 = vmatmul.mubr.bf16.gmra.mrb[0].mxu0 %v560
    %v708 = vpop.f32.mrb[0].mxu0
    %v709 = vadd.f32 %v584, %v708
    %v710 = vpop.f32.mrb[0].mxu0
    %v711 = vpop.f32.mrb[0].mxu0
    %v712 = vadd.f32 %v584, %v711
    %v713 = vpop.f32.mrb[0].mxu0
    %714 = vmatprep.mubr.bf16.mxu0 0
    %715 = vmatmul.mubr.bf16.gmra.mrb[0].mxu0 %v561
    %v716 = vpop.f32.mrb[0].mxu0
    %v717 = vadd.f32 %v584, %v716
    %v718 = vpop.f32.mrb[0].mxu0
    %v719 = vpop.f32.mrb[0].mxu0
    %v720 = vadd.f32 %v584, %v719
    %v721 = vpop.f32.mrb[0].mxu0
    %722 = vmatprep.mubr.bf16.mxu0 0
    %723 = vmatmul.mubr.bf16.gmra.mrb[0].mxu0 %v562
    %v724 = vpop.f32.mrb[0].mxu0
    %v725 = vadd.f32 %v584, %v724
    %v726 = vpop.f32.mrb[0].mxu0
    %v727 = vpop.f32.mrb[0].mxu0
    %v728 = vadd.f32 %v584, %v727
    %v729 = vpop.f32.mrb[0].mxu0
    %730 = vdwg.mxu0
    %v731 = vadd.f32 %v92, %v669
    %v732 = vadd.f32 %v93, %v672
    %v733 = vadd.f32 %v94, %v677
    %v734 = vadd.f32 %v95, %v680
    %v735 = vadd.f32 %v96, %v685
    %v736 = vadd.f32 %v97, %v688
    %v737 = vadd.f32 %v98, %v693
    %v738 = vadd.f32 %v99, %v696
    %v739 = vadd.f32 %v100, %v701
    %v740 = vadd.f32 %v101, %v704
    %v741 = vadd.f32 %v102, %v709
    %v742 = vadd.f32 %v103, %v712
    %v743 = vadd.f32 %v104, %v717
    %v744 = vadd.f32 %v105, %v720
    %v745 = vadd.f32 %v106, %v725
    %v746 = vadd.f32 %v107, %v728
    %747 = vst [vmem:[#allocation10] sm:$0xff] %v731
    %748 = vst [vmem:[#allocation10 + $0x8] sm:$0xff] %v732
    %749 = vst [vmem:[#allocation10 + $0x10] sm:$0xff] %v733
    %750 = vst [vmem:[#allocation10 + $0x18] sm:$0xff] %v734
    %751 = vst [vmem:[#allocation10 + $0x20] sm:$0xff] %v735
    %752 = vst [vmem:[#allocation10 + $0x28] sm:$0xff] %v736
    %753 = vst [vmem:[#allocation10 + $0x30] sm:$0xff] %v737
    %754 = vst [vmem:[#allocation10 + $0x38] sm:$0xff] %v738
    %755 = vst [vmem:[#allocation10 + $0x40] sm:$0xff] %v739
    %756 = vst [vmem:[#allocation10 + $0x48] sm:$0xff] %v740
    %757 = vst [vmem:[#allocation10 + $0x50] sm:$0xff] %v741
    %758 = vst [vmem:[#allocation10 + $0x58] sm:$0xff] %v742
    %759 = vst [vmem:[#allocation10 + $0x60] sm:$0xff] %v743
    %760 = vst [vmem:[#allocation10 + $0x68] sm:$0xff] %v744
    %761 = vst [vmem:[#allocation10 + $0x70] sm:$0xff] %v745
    %762 = vst [vmem:[#allocation10 + $0x78] sm:$0xff] %v746
    %v763 = vpack.c.bf16 %v732, %v731
    %v764 = vpack.c.bf16 %v734, %v733
    %v765 = vpack.c.bf16 %v736, %v735
    %v766 = vpack.c.bf16 %v738, %v737
    %v767 = vpack.c.bf16 %v740, %v739
    %v768 = vpack.c.bf16 %v742, %v741
    %v769 = vpack.c.bf16 %v744, %v743
    %v770 = vpack.c.bf16 %v746, %v745
    %v771 = vld [vmem:[#allocation8] sm:$0xf]
    %v772 = vld [vmem:[#allocation8 + $0x4] sm:$0xf]
    %v773 = vld [vmem:[#allocation8 + $0x8] sm:$0xf]
    %v774 = vld [vmem:[#allocation8 + $0xc] sm:$0xf]
    %v775 = vld [vmem:[#allocation8 + $0x10] sm:$0xf]
    %v776 = vld [vmem:[#allocation8 + $0x14] sm:$0xf]
    %v777 = vld [vmem:[#allocation8 + $0x18] sm:$0xf]
    %v778 = vld [vmem:[#allocation8 + $0x1c] sm:$0xf]
    %v779 = vld [vmem:[#allocation8 + $0x20] sm:$0xf]
    %v780 = vld [vmem:[#allocation8 + $0x24] sm:$0xf]
    %v781 = vld [vmem:[#allocation8 + $0x28] sm:$0xf]
    %v782 = vld [vmem:[#allocation8 + $0x2c] sm:$0xf]
    %v783 = vld [vmem:[#allocation8 + $0x30] sm:$0xf]
    %v784 = vld [vmem:[#allocation8 + $0x34] sm:$0xf]
    %v785 = vld [vmem:[#allocation8 + $0x38] sm:$0xf]
    %v786 = vld [vmem:[#allocation8 + $0x3c] sm:$0xf]
    %v787 = vld [vmem:[%s8] sm:$0x1]
    %v789 = vlaneseq
    %v790 = vshrl.u32 %v789, 7
    %v791 = vsub.s32 0, %v790
    %v792 = vrot.slane %v787, %v791
    %v810 = vunpack.c.l.b16 %v771
    %v811 = vunpack.c.l.b16 %v772
    %v812 = vunpack.c.l.b16 %v773
    %v813 = vunpack.c.l.b16 %v774
    %v814 = vunpack.c.l.b16 %v775
    %v815 = vunpack.c.l.b16 %v776
    %v816 = vunpack.c.l.b16 %v777
    %v817 = vunpack.c.l.b16 %v778
    %v818 = vunpack.c.l.b16 %v779
    %v819 = vunpack.c.l.b16 %v780
    %v820 = vunpack.c.l.b16 %v781
    %v821 = vunpack.c.l.b16 %v782
    %v822 = vunpack.c.l.b16 %v783
    %v823 = vunpack.c.l.b16 %v784
    %v824 = vunpack.c.l.b16 %v785
    %v825 = vunpack.c.l.b16 %v786
    %v826 = vpack.c.b16 %v811, %v810
    %v827 = vpack.c.b16 %v813, %v812
    %v828 = vpack.c.b16 %v815, %v814
    %v829 = vpack.c.b16 %v817, %v816
    %v830 = vpack.c.b16 %v819, %v818
    %v831 = vpack.c.b16 %v821, %v820
    %v832 = vpack.c.b16 %v823, %v822
    %v833 = vpack.c.b16 %v825, %v824
    %842 = vmatprep.subr.bf16.mxu0 0
    %843 = vmatpush1.bf16.msra.mxu0 %v826
    %844 = vmatprep.subr.bf16.mxu0 0
    %845 = vmatpush1.bf16.msra.mxu0 %v827
    %846 = vmatprep.subr.bf16.mxu0 0
    %847 = vmatpush1.bf16.msra.mxu0 %v828
    %848 = vmatprep.subr.bf16.mxu0 0
    %849 = vmatpush1.bf16.msra.mxu0 %v829
    %850 = vmatprep.subr.bf16.mxu0 0
    %851 = vmatpush1.bf16.msra.mxu0 %v830
    %852 = vmatprep.subr.bf16.mxu0 0
    %853 = vmatpush1.bf16.msra.mxu0 %v831
    %854 = vmatprep.subr.bf16.mxu0 0
    %855 = vmatpush1.bf16.msra.mxu0 %v832
    %856 = vmatprep.subr.bf16.mxu0 0
    %857 = vmatpush1.bf16.msra.mxu0 %v833
    %858 = vmatprep.subr.bf16.mxu0 0
    %859 = vmatpush1.bf16.msra.mxu0 0
    %860 = vmatprep.subr.bf16.mxu0 0
    %861 = vmatpush1.bf16.msra.mxu0 0
    %862 = vmatprep.subr.bf16.mxu0 0
    %863 = vmatpush1.bf16.msra.mxu0 0
    %864 = vmatprep.subr.bf16.mxu0 0
    %865 = vmatpush1.bf16.msra.mxu0 0
    %866 = vmatprep.subr.bf16.mxu0 0
    %867 = vmatpush1.bf16.msra.mxu0 0
    %868 = vmatprep.subr.bf16.mxu0 0
    %869 = vmatpush1.bf16.msra.mxu0 0
    %870 = vmatprep.subr.bf16.mxu0 0
    %871 = vmatpush1.bf16.msra.mxu0 0
    %872 = vmatprep.subr.bf16.mxu0 0
    %873 = vmatpush1.bf16.msra.mxu0 0
    %874 = vmatprep.mubr.bf16.mxu0 0
    %875 = vmatmul.mubr.bf16.gmra.mrb[0].mxu0 %v763
    %v876 = vpop.f32.mrb[0].mxu0
    %v877 = vadd.f32 %v792, %v876
    %v878 = vpop.f32.mrb[0].mxu0
    %v879 = vpop.f32.mrb[0].mxu0
    %v880 = vadd.f32 %v792, %v879
    %v881 = vpop.f32.mrb[0].mxu0
    %882 = vmatprep.mubr.bf16.mxu0 0
    %883 = vmatmul.mubr.bf16.gmra.mrb[0].mxu0 %v764
    %v884 = vpop.f32.mrb[0].mxu0
    %v885 = vadd.f32 %v792, %v884
    %v886 = vpop.f32.mrb[0].mxu0
    %v887 = vpop.f32.mrb[0].mxu0
    %v888 = vadd.f32 %v792, %v887
    %v889 = vpop.f32.mrb[0].mxu0
    %890 = vmatprep.mubr.bf16.mxu0 0
    %891 = vmatmul.mubr.bf16.gmra.mrb[0].mxu0 %v765
    %v892 = vpop.f32.mrb[0].mxu0
    %v893 = vadd.f32 %v792, %v892
    %v894 = vpop.f32.mrb[0].mxu0
    %v895 = vpop.f32.mrb[0].mxu0
    %v896 = vadd.f32 %v792, %v895
    %v897 = vpop.f32.mrb[0].mxu0
    %898 = vmatprep.mubr.bf16.mxu0 0
    %899 = vmatmul.mubr.bf16.gmra.mrb[0].mxu0 %v766
    %v900 = vpop.f32.mrb[0].mxu0
    %v901 = vadd.f32 %v792, %v900
    %v902 = vpop.f32.mrb[0].mxu0
    %v903 = vpop.f32.mrb[0].mxu0
    %v904 = vadd.f32 %v792, %v903
    %v905 = vpop.f32.mrb[0].mxu0
    %906 = vmatprep.mubr.bf16.mxu0 0
    %907 = vmatmul.mubr.bf16.gmra.mrb[0].mxu0 %v767
    %v908 = vpop.f32.mrb[0].mxu0
    %v909 = vadd.f32 %v792, %v908
    %v910 = vpop.f32.mrb[0].mxu0
    %v911 = vpop.f32.mrb[0].mxu0
    %v912 = vadd.f32 %v792, %v911
    %v913 = vpop.f32.mrb[0].mxu0
    %914 = vmatprep.mubr.bf16.mxu0 0
    %915 = vmatmul.mubr.bf16.gmra.mrb[0].mxu0 %v768
    %v916 = vpop.f32.mrb[0].mxu0
    %v917 = vadd.f32 %v792, %v916
    %v918 = vpop.f32.mrb[0].mxu0
    %v919 = vpop.f32.mrb[0].mxu0
    %v920 = vadd.f32 %v792, %v919
    %v921 = vpop.f32.mrb[0].mxu0
    %922 = vmatprep.mubr.bf16.mxu0 0
    %923 = vmatmul.mubr.bf16.gmra.mrb[0].mxu0 %v769
    %v924 = vpop.f32.mrb[0].mxu0
    %v925 = vadd.f32 %v792, %v924
    %v926 = vpop.f32.mrb[0].mxu0
    %v927 = vpop.f32.mrb[0].mxu0
    %v928 = vadd.f32 %v792, %v927
    %v929 = vpop.f32.mrb[0].mxu0
    %930 = vmatprep.mubr.bf16.mxu0 0
    %931 = vmatmul.mubr.bf16.gmra.mrb[0].mxu0 %v770
    %v932 = vpop.f32.mrb[0].mxu0
    %v933 = vadd.f32 %v792, %v932
    %v934 = vpop.f32.mrb[0].mxu0
    %v935 = vpop.f32.mrb[0].mxu0
    %v936 = vadd.f32 %v792, %v935
    %v937 = vpop.f32.mrb[0].mxu0
    %938 = vdwg.mxu0
    %939 = vst [vmem:[#allocation11] sm:$0xff] %v877
    %940 = vst [vmem:[#allocation11 + $0x8] sm:$0xff] %v880
    %941 = vst [vmem:[#allocation11 + $0x10] sm:$0xff] %v885
    %942 = vst [vmem:[#allocation11 + $0x18] sm:$0xff] %v888
    %943 = vst [vmem:[#allocation11 + $0x20] sm:$0xff] %v893
    %944 = vst [vmem:[#allocation11 + $0x28] sm:$0xff] %v896
    %945 = vst [vmem:[#allocation11 + $0x30] sm:$0xff] %v901
    %946 = vst [vmem:[#allocation11 + $0x38] sm:$0xff] %v904
    %947 = vst [vmem:[#allocation11 + $0x40] sm:$0xff] %v909
    %948 = vst [vmem:[#allocation11 + $0x48] sm:$0xff] %v912
    %949 = vst [vmem:[#allocation11 + $0x50] sm:$0xff] %v917
    %950 = vst [vmem:[#allocation11 + $0x58] sm:$0xff] %v920
    %951 = vst [vmem:[#allocation11 + $0x60] sm:$0xff] %v925
    %952 = vst [vmem:[#allocation11 + $0x68] sm:$0xff] %v928
    %953 = vst [vmem:[#allocation11 + $0x70] sm:$0xff] %v933
    %954 = vst [vmem:[#allocation11 + $0x78] sm:$0xff] %v936
    // Predicated region
    $region54: #{tpu_custom_call.1} parent=1 // pred_check
      _
    $region55: #{tpu_custom_call.1} parent=1 // pred_check_branch
      %956 = sbr.rel (0) target = $region57
    $region56: #{tpu_custom_call.1} parent=1 // pred_region
      %s958 = ssub.s32 2048, 2048
      %959 = vsyncadd [#allocation4], %s958
      %s960 = sshll.u32 [#allocation10], 4
      %s961 = int_to_ptr.vmem [resolvable:$true] %s960
      %966 = dma.vmem_to_hbm [thread:$0]  %s961, 2048, %s9, [#allocation4], 128, 128, 8
    $region57: #{tpu_custom_call.1} parent=1 // pred_fallthru
      _
    // Predicated region
    $region58: #{tpu_custom_call.1} parent=1 // pred_check
      _
    $region59: #{tpu_custom_call.1} parent=1 // pred_check_branch
      %968 = sbr.rel (0) target = $region61
    $region60: #{tpu_custom_call.1} parent=1 // pred_region
      %s970 = ssub.s32 2048, 2048
      %971 = vsyncadd [#allocation12], %s970
      %s972 = sshll.u32 [#allocation11], 4
      %s973 = int_to_ptr.vmem [resolvable:$true] %s972
      %978 = dma.vmem_to_hbm [thread:$0]  %s973, 2048, %s10, [#allocation12], 128, 128, 8
    $region61: #{tpu_custom_call.1} parent=1 // pred_fallthru
      _
    // Predicated region
    $region62: #{tpu_custom_call.1} parent=1 // pred_check
      _
    $region63: #{tpu_custom_call.1} parent=1 // pred_check_branch
      %980 = sbr.rel (0) target = $region65
    $region64: #{tpu_custom_call.1} parent=1 // pred_region
      %981 = dma.done [#allocation4], 2048
    $region65: #{tpu_custom_call.1} parent=1 // pred_fallthru
      _
    // Predicated region
    $region66: #{tpu_custom_call.1} parent=1 // pred_check
      _
    $region67: #{tpu_custom_call.1} parent=1 // pred_check_branch
      %983 = sbr.rel (0) target = $region69
    $region68: #{tpu_custom_call.1} parent=1 // pred_region
      %984 = dma.done [#allocation12], 2048
    $region69: #{tpu_custom_call.1} parent=1 // pred_fallthru
      _
    %985 = vsyncpa [#allocation3], 1
    %986 = vsyncpa [#allocation6], 1
    %987 = vsyncpa [#allocation9], 1
    %988 = vsyncpa [#allocation4], 1
    %989 = vsyncpa [#allocation12], 1

</llo_original>
